<compile_context>
chip_gen: v7x
topology: tpu7x:2x2x1
jax: 0.10.0
libtpu: 0.0.40
codegen_flags: <defaults>
</compile_context>

<pallas_src>
import jax
import jax.numpy as jnp
from jax import lax
from jax.experimental import pallas as pl
from jax.experimental.pallas import tpu as pltpu


def _make_kernel(H, W, K, nconvs, cin, cm, cout, cmax):
    p = K // 2
    HW = H * W
    base = p * W + p  # flat offset of activation element (h=0, w=0) in the scratch

    def kernel(x_ref, w_ref, b_ref, wt_ref, bt_ref, out_ref, act_ref):
        # --- zero the H-padded flat activation scratch ONCE per grid step ---
        # (only the border region ever needs zeros; the interior is fully
        #  overwritten by every layer; stale channels are hit by zero weights)
        act_ref[...] = jnp.zeros_like(act_ref)
        act_ref[0:cin, base:base + HW] = x_ref[...].astype(jnp.float32)

        # column-validity masks (shared by all layers, tiny (1, HW) constants)
        w_idx = lax.broadcasted_iota(jnp.int32, (1, HW), 1) % W
        masks = {}
        for dw in range(-p, p + 1):
            masks[dw] = None if dw == 0 else ((w_idx + dw >= 0) & (w_idx + dw < W))

        def im2col():
            # (K*K*cmax, HW) patch matrix, spatial in lanes.  Row-shift handled by
            # the flat lane offset (rows above/below the image are zeros in the
            # scratch); column wrap handled by the masks.
            parts = []
            for kh in range(K):
                for kw in range(K):
                    dh, dw = kh - p, kw - p
                    start = base + dh * W + dw          # always >= 0, static
                    win = act_ref[:, start:start + HW]  # (cmax, HW) f32
                    m = masks[dw]
                    if m is not None:
                        win = jnp.where(m, win, jnp.zeros_like(win))
                    parts.append(win)
            return jnp.concatenate(parts, axis=0)       # (K*K*cmax, HW)

        cur = None
        for i in range(nconvs):
            patch = im2col().astype(jnp.bfloat16)
            acc = jnp.dot(w_ref[i], patch,                       # (cm, HW) f32 acc
                          preferred_element_type=jnp.float32)
            cur = jnp.maximum(acc + b_ref[i], 0.0)               # bias + ReLU in f32
            if i + 1 < nconvs:
                act_ref[0:cm, base:base + HW] = cur              # re-use scratch

        # --- fused ConvTranspose2d(kernel=2, stride=2): no overlap ->
        #     out[o, 2h+i, 2w+j] = sum_c cur[c, h*W+w] * Wt[c, o, i, j] + bt[o]
        z = jnp.dot(wt_ref[...], cur.astype(jnp.bfloat16),
                    preferred_element_type=jnp.float32) + bt_ref[...]  # (4*cout, HW)
        out_ref[...] = z

    return kernel


def decoder_block_u_forward(x_nchw, conv_params, tconv_params, *, ksize):
    """conv_params: [(w_oihw_bnfolded (co,ci,K,K) f32, b_folded (co,) f32), ...]
       tconv_params: (wt (cm,cout,2,2) f32, bt (cout,) f32)."""
    N, cin, H, W = x_nchw.shape
    K = ksize
    assert K % 2 == 1, "same-padding conv assumes odd kernel size"
    p = K // 2
    HW = H * W
    nconvs = len(conv_params)
    cm = conv_params[0][0].shape[0]
    cmax = max(cin, cm)
    wt, bt = tconv_params
    cout = wt.shape[1]
    L = HW + 2 * (p * W + p)  # flat scratch length (H-padding rows on both sides)

    # ---- pack all conv params into one bf16 weight + one f32 bias tensor ----
    w_rows, b_rows = [], []
    for (w, b) in conv_params:                        # w: OIHW
        co, ci = w.shape[0], w.shape[1]
        w_okkc = jnp.transpose(w, (0, 2, 3, 1))       # (co, K, K, ci)
        w_pad = jnp.zeros((co, K, K, cmax), jnp.float32).at[..., :ci].set(w_okkc)
        w_rows.append(w_pad.reshape(co, K * K * cmax))
        b_rows.append(b.reshape(co, 1))
    w_all = jnp.stack(w_rows).astype(jnp.bfloat16)    # (nconvs, cm, K*K*cmax)
    b_all = jnp.stack(b_rows).astype(jnp.float32)     # (nconvs, cm, 1)

    # ---- pack the transpose-conv as one matmul: row ordering (i, j, o) ----
    wt4 = jnp.transpose(wt, (2, 3, 1, 0)).reshape(4 * cout, cm).astype(jnp.bfloat16)
    bt4 = jnp.tile(bt.reshape(1, cout), (4, 1)).reshape(4 * cout, 1).astype(jnp.float32)

    x_flat = x_nchw.reshape(N, cin, HW).astype(jnp.bfloat16)   # spatial-in-lanes, bf16 DMA

    kernel = _make_kernel(H, W, K, nconvs, cin, cm, cout, cmax)

    out_flat = pl.pallas_call(
        kernel,
        out_shape=jax.ShapeDtypeStruct((N, 4 * cout, HW), jnp.float32),
        grid_spec=pltpu.PrefetchScalarGridSpec(
            num_scalar_prefetch=0,
            grid=(N,),
            in_specs=[
                pl.BlockSpec((None, cin, HW), lambda n: (n, 0, 0)),
                pl.BlockSpec(w_all.shape, lambda n: (0, 0, 0)),
                pl.BlockSpec(b_all.shape, lambda n: (0, 0, 0)),
                pl.BlockSpec(wt4.shape, lambda n: (0, 0)),
                pl.BlockSpec(bt4.shape, lambda n: (0, 0)),
            ],
            out_specs=pl.BlockSpec((None, 4 * cout, HW), lambda n: (n, 0, 0)),
            scratch_shapes=[pltpu.VMEM((cmax, L), jnp.float32)],
        ),
        compiler_params=pltpu.CompilerParams(
            dimension_semantics=("parallel",),
            vmem_limit_bytes=32 * 1024 * 1024,
        ),
    )(x_flat, w_all, b_all, wt4, bt4)

    # (N, 4*cout, H*W) -> NCHW (N, cout, 2H, 2W):
    #   out[n, o, 2h+i, 2w+j] = out_flat[n, (2i+j)*cout + o, h*W + w]
    out = out_flat.reshape(N, 2, 2, cout, H, W)
    out = jnp.transpose(out, (0, 3, 4, 1, 5, 2))      # (N, cout, H, 2, W, 2)
    return out.reshape(N, cout, 2 * H, 2 * W)


def init_params(key, in_channels, m_channels, out_channels, ksize, nconvs):
    """Deterministic synthetic parameters; eval-mode BN folded into the conv."""
    eps = 1e-5
    conv_params = []
    cin = in_channels
    keys = jax.random.split(key, nconvs + 1)
    for i in range(nconvs):
        k = jax.random.split(keys[i], 6)
        w = 0.1 * jax.random.normal(k[0], (m_channels, cin, ksize, ksize), jnp.float32)
        b = 0.1 * jax.random.normal(k[1], (m_channels,), jnp.float32)
        gamma = 1.0 + 0.1 * jax.random.normal(k[2], (m_channels,), jnp.float32)
        beta = 0.1 * jax.random.normal(k[3], (m_channels,), jnp.float32)
        mean = 0.1 * jax.random.normal(k[4], (m_channels,), jnp.float32)
        var = jax.nn.softplus(jax.random.normal(k[5], (m_channels,), jnp.float32))
        scale = gamma / jnp.sqrt(var + eps)
        w_eff = w * scale[:, None, None, None]
        b_eff = beta + scale * (b - mean)
        conv_params.append((w_eff, b_eff))
        cin = m_channels
    kt = jax.random.split(keys[-1], 2)
    wt = 0.1 * jax.random.normal(kt[0], (m_channels, out_channels, 2, 2), jnp.float32)
    bt = 0.1 * jax.random.normal(kt[1], (out_channels,), jnp.float32)
    return conv_params, (wt, bt)


def reference_forward(x_nchw, conv_params, tconv_params, ksize,
                      weight_dtype=jnp.bfloat16):
    """Pure-JAX reference with PyTorch semantics (NCHW).  Weights are rounded to
    the kernel's bf16 storage dtype so the comparison isolates the kernel's
    activation rounding (covered by the test tolerance)."""
    p = ksize // 2
    y = x_nchw
    for (w, b) in conv_params:
        w_q = w.astype(weight_dtype).astype(jnp.float32)
        y = lax.conv_general_dilated(
            y, w_q, window_strides=(1, 1), padding=[(p, p), (p, p)],
            dimension_numbers=("NCHW", "OIHW", "NCHW"))
        y = jnp.maximum(y + b.reshape(1, -1, 1, 1), 0.0)
    wt, bt = tconv_params
    wt_q = wt.astype(weight_dtype).astype(jnp.float32)
    N, _, H, W = y.shape
    cout = wt.shape[1]
    z = jnp.einsum("nchw,coij->nohiwj", y, wt_q)
    z = z.reshape(N, cout, 2 * H, 2 * W) + bt.reshape(1, cout, 1, 1)
    return z


if __name__ == "__main__":
    in_channels, m_channels, out_channels = 4, 8, 4
    ksize, nconvs = 3, 2
    N, H, W = 2, 16, 16

    key = jax.random.PRNGKey(0)
    kx, kp = jax.random.split(key)

    x_nchw = jax.random.normal(kx, (N, in_channels, H, W), jnp.float32)
    conv_params, tconv_params = init_params(
        kp, in_channels, m_channels, out_channels, ksize, nconvs)

    out = decoder_block_u_forward(x_nchw, conv_params, tconv_params, ksize=ksize)
    out = jax.block_until_ready(out)

    ref = reference_forward(x_nchw, conv_params, tconv_params, ksize)
    assert out.shape == (N, out_channels, 2 * H, 2 * W), out.shape
    max_err = float(jnp.max(jnp.abs(out - ref)))
    # bf16 matmul operands with f32 accumulation -> loosened tolerance
    assert jnp.allclose(out, ref, atol=5e-2, rtol=5e-2), max_err
    print("KERNEL_OK")
</pallas_src>

<mosaic_0001>
module attributes {stable_mosaic.version = 11 : i64} {
  func.func @kernel(%arg0: i32, %arg1: memref<1x4x256xbf16, #tpu.memory_space<vmem>>, %arg2: memref<2x8x72xbf16, #tpu.memory_space<vmem>>, %arg3: memref<2x8x1xf32, #tpu.memory_space<vmem>>, %arg4: memref<16x8xbf16, #tpu.memory_space<vmem>>, %arg5: memref<16x1xf32, #tpu.memory_space<vmem>>, %arg6: memref<1x16x256xf32, #tpu.memory_space<vmem>>, %arg7: memref<8x290xf32, #tpu.memory_space<vmem>>) attributes {dimension_semantics = [#tpu.dimension_semantics<parallel>], iteration_bounds = array<i64: 2>, scalar_prefetch = 0 : i64, scratch_operands = 1 : i64, tpu.core_type = #tpu.core_type<tc>, window_params = [{transform_indices = @transform_0, window_bounds = array<i64: 1, 4, 256>}, {pipeline_mode = #tpu.pipeline_mode<synchronous>, transform_indices = @transform_1, window_bounds = array<i64: 2, 8, 72>}, {pipeline_mode = #tpu.pipeline_mode<synchronous>, transform_indices = @transform_2, window_bounds = array<i64: 2, 8, 1>}, {pipeline_mode = #tpu.pipeline_mode<synchronous>, transform_indices = @transform_3, window_bounds = array<i64: 16, 8>}, {pipeline_mode = #tpu.pipeline_mode<synchronous>, transform_indices = @transform_4, window_bounds = array<i64: 16, 1>}, {transform_indices = @transform_5, window_bounds = array<i64: 1, 16, 256>}]} {
    %cst = arith.constant 0.000000e+00 : f32
    %0 = vector.broadcast %cst : f32 to vector<8x290xf32>
    %c0 = arith.constant 0 : index
    %c0_0 = arith.constant 0 : index
    %1 = vector.load %arg7[%c0, %c0_0] : memref<8x290xf32, #tpu.memory_space<vmem>>, vector<8x290xf32>
    tpu.vector_store %arg7[%c0, %c0_0], %0 {strides = array<i32>} : memref<8x290xf32, #tpu.memory_space<vmem>>, vector<8x290xf32>,
    %c0_1 = arith.constant 0 : index
    %c0_2 = arith.constant 0 : index
    %c0_3 = arith.constant 0 : index
    %2 = vector.load %arg1[%c0_1, %c0_2, %c0_3] : memref<1x4x256xbf16, #tpu.memory_space<vmem>>, vector<1x4x256xbf16>
    %3 = vector.shape_cast %2 : vector<1x4x256xbf16> to vector<4x256xbf16>
    %4 = arith.extf %3 : vector<4x256xbf16> to vector<4x256xf32>
    %c0_4 = arith.constant 0 : index
    %c17 = arith.constant 17 : index
    %5 = vector.load %arg7[%c0_4, %c17] : memref<8x290xf32, #tpu.memory_space<vmem>>, vector<4x256xf32>
    tpu.vector_store %arg7[%c0_4, %c17], %4 {strides = array<i32>} : memref<8x290xf32, #tpu.memory_space<vmem>>, vector<4x256xf32>,
    %6 = tpu.iota {dimensions = array<i32: 1>} : vector<1x256xi32>
    %c16_i32 = arith.constant 16 : i32
    %c0_i32 = arith.constant 0 : i32
    %7 = arith.cmpi eq, %c16_i32, %c0_i32 : i32
    %c1_i32 = arith.constant 1 : i32
    %8 = arith.select %7, %c1_i32, %c16_i32 : i32
    %9 = vector.broadcast %8 : i32 to vector<1x256xi32>
    %10 = arith.remsi %6, %9 : vector<1x256xi32>
    %c0_i32_5 = arith.constant 0 : i32
    %11 = vector.broadcast %c0_i32_5 : i32 to vector<1x256xi32>
    %12 = arith.cmpi ne, %10, %11 : vector<1x256xi32>
    %c0_i32_6 = arith.constant 0 : i32
    %13 = vector.broadcast %c0_i32_6 : i32 to vector<1x256xi32>
    %14 = arith.cmpi slt, %10, %13 : vector<1x256xi32>
    %c0_i32_7 = arith.constant 0 : i32
    %15 = arith.cmpi slt, %8, %c0_i32_7 : i32
    %16 = vector.broadcast %15 : i1 to vector<1x256xi1>
    %17 = vector.broadcast %16 : vector<1x256xi1> to vector<1x256xi1>
    %18 = arith.xori %14, %17 : vector<1x256xi1>
    %19 = arith.andi %18, %12 : vector<1x256xi1>
    %20 = vector.broadcast %8 : i32 to vector<1x256xi32>
    %21 = arith.addi %10, %20 : vector<1x256xi32>
    %22 = arith.select %19, %21, %10 : vector<1x256xi1>, vector<1x256xi32>
    %c-1_i32 = arith.constant -1 : i32
    %23 = vector.broadcast %c-1_i32 : i32 to vector<1x256xi32>
    %24 = arith.addi %22, %23 : vector<1x256xi32>
    %c0_i32_8 = arith.constant 0 : i32
    %25 = vector.broadcast %c0_i32_8 : i32 to vector<1x256xi32>
    %26 = arith.cmpi sge, %24, %25 : vector<1x256xi32>
    %c-1_i32_9 = arith.constant -1 : i32
    %27 = vector.broadcast %c-1_i32_9 : i32 to vector<1x256xi32>
    %28 = arith.addi %22, %27 : vector<1x256xi32>
    %c16_i32_10 = arith.constant 16 : i32
    %29 = vector.broadcast %c16_i32_10 : i32 to vector<1x256xi32>
    %30 = arith.cmpi slt, %28, %29 : vector<1x256xi32>
    %31 = arith.andi %26, %30 : vector<1x256xi1>
    %c1_i32_11 = arith.constant 1 : i32
    %32 = vector.broadcast %c1_i32_11 : i32 to vector<1x256xi32>
    %33 = arith.addi %22, %32 : vector<1x256xi32>
    %c0_i32_12 = arith.constant 0 : i32
    %34 = vector.broadcast %c0_i32_12 : i32 to vector<1x256xi32>
    %35 = arith.cmpi sge, %33, %34 : vector<1x256xi32>
    %c1_i32_13 = arith.constant 1 : i32
    %36 = vector.broadcast %c1_i32_13 : i32 to vector<1x256xi32>
    %37 = arith.addi %22, %36 : vector<1x256xi32>
    %c16_i32_14 = arith.constant 16 : i32
    %38 = vector.broadcast %c16_i32_14 : i32 to vector<1x256xi32>
    %39 = arith.cmpi slt, %37, %38 : vector<1x256xi32>
    %40 = arith.andi %35, %39 : vector<1x256xi1>
    %c0_15 = arith.constant 0 : index
    %c0_16 = arith.constant 0 : index
    %41 = vector.load %arg7[%c0_15, %c0_16] : memref<8x290xf32, #tpu.memory_space<vmem>>, vector<8x256xf32>
    %cst_17 = arith.constant 0.000000e+00 : f32
    %42 = vector.broadcast %cst_17 : f32 to vector<8x256xf32>
    %43 = vector.shape_cast %31 : vector<1x256xi1> to vector<1x256xi1>
    %44 = vector.broadcast %43 : vector<1x256xi1> to vector<8x256xi1>
    %45 = arith.select %44, %41, %42 : vector<8x256xi1>, vector<8x256xf32>
    %c0_18 = arith.constant 0 : index
    %c1 = arith.constant 1 : index
    %46 = vector.load %arg7[%c0_18, %c1] : memref<8x290xf32, #tpu.memory_space<vmem>>, vector<8x256xf32>
    %c0_19 = arith.constant 0 : index
    %c2 = arith.constant 2 : index
    %47 = vector.load %arg7[%c0_19, %c2] : memref<8x290xf32, #tpu.memory_space<vmem>>, vector<8x256xf32>
    %cst_20 = arith.constant 0.000000e+00 : f32
    %48 = vector.broadcast %cst_20 : f32 to vector<8x256xf32>
    %49 = vector.shape_cast %40 : vector<1x256xi1> to vector<1x256xi1>
    %50 = vector.broadcast %49 : vector<1x256xi1> to vector<8x256xi1>
    %51 = arith.select %50, %47, %48 : vector<8x256xi1>, vector<8x256xf32>
    %c0_21 = arith.constant 0 : index
    %c16 = arith.constant 16 : index
    %52 = vector.load %arg7[%c0_21, %c16] : memref<8x290xf32, #tpu.memory_space<vmem>>, vector<8x256xf32>
    %cst_22 = arith.constant 0.000000e+00 : f32
    %53 = vector.broadcast %cst_22 : f32 to vector<8x256xf32>
    %54 = vector.shape_cast %31 : vector<1x256xi1> to vector<1x256xi1>
    %55 = vector.broadcast %54 : vector<1x256xi1> to vector<8x256xi1>
    %56 = arith.select %55, %52, %53 : vector<8x256xi1>, vector<8x256xf32>
    %c0_23 = arith.constant 0 : index
    %c17_24 = arith.constant 17 : index
    %57 = vector.load %arg7[%c0_23, %c17_24] : memref<8x290xf32, #tpu.memory_space<vmem>>, vector<8x256xf32>
    %c0_25 = arith.constant 0 : index
    %c18 = arith.constant 18 : index
    %58 = vector.load %arg7[%c0_25, %c18] : memref<8x290xf32, #tpu.memory_space<vmem>>, vector<8x256xf32>
    %cst_26 = arith.constant 0.000000e+00 : f32
    %59 = vector.broadcast %cst_26 : f32 to vector<8x256xf32>
    %60 = vector.shape_cast %40 : vector<1x256xi1> to vector<1x256xi1>
    %61 = vector.broadcast %60 : vector<1x256xi1> to vector<8x256xi1>
    %62 = arith.select %61, %58, %59 : vector<8x256xi1>, vector<8x256xf32>
    %c0_27 = arith.constant 0 : index
    %c32 = arith.constant 32 : index
    %63 = vector.load %arg7[%c0_27, %c32] : memref<8x290xf32, #tpu.memory_space<vmem>>, vector<8x256xf32>
    %cst_28 = arith.constant 0.000000e+00 : f32
    %64 = vector.broadcast %cst_28 : f32 to vector<8x256xf32>
    %65 = vector.shape_cast %31 : vector<1x256xi1> to vector<1x256xi1>
    %66 = vector.broadcast %65 : vector<1x256xi1> to vector<8x256xi1>
    %67 = arith.select %66, %63, %64 : vector<8x256xi1>, vector<8x256xf32>
    %c0_29 = arith.constant 0 : index
    %c33 = arith.constant 33 : index
    %68 = vector.load %arg7[%c0_29, %c33] : memref<8x290xf32, #tpu.memory_space<vmem>>, vector<8x256xf32>
    %c0_30 = arith.constant 0 : index
    %c34 = arith.constant 34 : index
    %69 = vector.load %arg7[%c0_30, %c34] : memref<8x290xf32, #tpu.memory_space<vmem>>, vector<8x256xf32>
    %cst_31 = arith.constant 0.000000e+00 : f32
    %70 = vector.broadcast %cst_31 : f32 to vector<8x256xf32>
    %71 = vector.shape_cast %40 : vector<1x256xi1> to vector<1x256xi1>
    %72 = vector.broadcast %71 : vector<1x256xi1> to vector<8x256xi1>
    %73 = arith.select %72, %69, %70 : vector<8x256xi1>, vector<8x256xf32>
    %74 = tpu.concatenate %45, %46, %51, %56, %57, %62, %67, %68, %73 in 0 : vector<8x256xf32>, vector<8x256xf32>, vector<8x256xf32>, vector<8x256xf32>, vector<8x256xf32>, vector<8x256xf32>, vector<8x256xf32>, vector<8x256xf32>, vector<8x256xf32> -> vector<72x256xf32>
    %75 = arith.truncf %74 : vector<72x256xf32> to vector<72x256xbf16>
    %c0_32 = arith.constant 0 : index
    %c0_33 = arith.constant 0 : index
    %c0_34 = arith.constant 0 : index
    %76 = vector.load %arg2[%c0_32, %c0_33, %c0_34] : memref<2x8x72xbf16, #tpu.memory_space<vmem>>, vector<1x8x72xbf16>
    %77 = vector.shape_cast %76 : vector<1x8x72xbf16> to vector<8x72xbf16>
    %cst_35 = arith.constant dense<0.000000e+00> : vector<8x256xf32>
    %78 = tpu.matmul %77, %75, %cst_35 {dimension_numbers = #tpu.dot_dimension_numbers<[1], [0], [0], [1], [0, 0, 1, 1], [], []>} : vector<8x72xbf16>, vector<72x256xbf16>, vector<8x256xf32> -> vector<8x256xf32>
    %c0_36 = arith.constant 0 : index
    %c0_37 = arith.constant 0 : index
    %c0_38 = arith.constant 0 : index
    %79 = vector.load %arg3[%c0_36, %c0_37, %c0_38] : memref<2x8x1xf32, #tpu.memory_space<vmem>>, vector<1x8x1xf32>
    %80 = vector.shape_cast %79 : vector<1x8x1xf32> to vector<8x1xf32>
    %81 = vector.broadcast %80 : vector<8x1xf32> to vector<8x256xf32>
    %82 = arith.addf %78, %81 : vector<8x256xf32>
    %cst_39 = arith.constant 0.000000e+00 : f32
    %83 = vector.broadcast %cst_39 : f32 to vector<8x256xf32>
    %84 = arith.maximumf %82, %83 : vector<8x256xf32>
    %c0_40 = arith.constant 0 : index
    %c17_41 = arith.constant 17 : index
    %85 = vector.load %arg7[%c0_40, %c17_41] : memref<8x290xf32, #tpu.memory_space<vmem>>, vector<8x256xf32>
    tpu.vector_store %arg7[%c0_40, %c17_41], %84 {strides = array<i32>} : memref<8x290xf32, #tpu.memory_space<vmem>>, vector<8x256xf32>,
    %c0_42 = arith.constant 0 : index
    %c0_43 = arith.constant 0 : index
    %86 = vector.load %arg7[%c0_42, %c0_43] : memref<8x290xf32, #tpu.memory_space<vmem>>, vector<8x256xf32>
    %cst_44 = arith.constant 0.000000e+00 : f32
    %87 = vector.broadcast %cst_44 : f32 to vector<8x256xf32>
    %88 = vector.shape_cast %31 : vector<1x256xi1> to vector<1x256xi1>
    %89 = vector.broadcast %88 : vector<1x256xi1> to vector<8x256xi1>
    %90 = arith.select %89, %86, %87 : vector<8x256xi1>, vector<8x256xf32>
    %c0_45 = arith.constant 0 : index
    %c1_46 = arith.constant 1 : index
    %91 = vector.load %arg7[%c0_45, %c1_46] : memref<8x290xf32, #tpu.memory_space<vmem>>, vector<8x256xf32>
    %c0_47 = arith.constant 0 : index
    %c2_48 = arith.constant 2 : index
    %92 = vector.load %arg7[%c0_47, %c2_48] : memref<8x290xf32, #tpu.memory_space<vmem>>, vector<8x256xf32>
    %cst_49 = arith.constant 0.000000e+00 : f32
    %93 = vector.broadcast %cst_49 : f32 to vector<8x256xf32>
    %94 = vector.shape_cast %40 : vector<1x256xi1> to vector<1x256xi1>
    %95 = vector.broadcast %94 : vector<1x256xi1> to vector<8x256xi1>
    %96 = arith.select %95, %92, %93 : vector<8x256xi1>, vector<8x256xf32>
    %c0_50 = arith.constant 0 : index
    %c16_51 = arith.constant 16 : index
    %97 = vector.load %arg7[%c0_50, %c16_51] : memref<8x290xf32, #tpu.memory_space<vmem>>, vector<8x256xf32>
    %cst_52 = arith.constant 0.000000e+00 : f32
    %98 = vector.broadcast %cst_52 : f32 to vector<8x256xf32>
    %99 = vector.shape_cast %31 : vector<1x256xi1> to vector<1x256xi1>
    %100 = vector.broadcast %99 : vector<1x256xi1> to vector<8x256xi1>
    %101 = arith.select %100, %97, %98 : vector<8x256xi1>, vector<8x256xf32>
    %c0_53 = arith.constant 0 : index
    %c17_54 = arith.constant 17 : index
    %102 = vector.load %arg7[%c0_53, %c17_54] : memref<8x290xf32, #tpu.memory_space<vmem>>, vector<8x256xf32>
    %c0_55 = arith.constant 0 : index
    %c18_56 = arith.constant 18 : index
    %103 = vector.load %arg7[%c0_55, %c18_56] : memref<8x290xf32, #tpu.memory_space<vmem>>, vector<8x256xf32>
    %cst_57 = arith.constant 0.000000e+00 : f32
    %104 = vector.broadcast %cst_57 : f32 to vector<8x256xf32>
    %105 = vector.shape_cast %40 : vector<1x256xi1> to vector<1x256xi1>
    %106 = vector.broadcast %105 : vector<1x256xi1> to vector<8x256xi1>
    %107 = arith.select %106, %103, %104 : vector<8x256xi1>, vector<8x256xf32>
    %c0_58 = arith.constant 0 : index
    %c32_59 = arith.constant 32 : index
    %108 = vector.load %arg7[%c0_58, %c32_59] : memref<8x290xf32, #tpu.memory_space<vmem>>, vector<8x256xf32>
    %cst_60 = arith.constant 0.000000e+00 : f32
    %109 = vector.broadcast %cst_60 : f32 to vector<8x256xf32>
    %110 = vector.shape_cast %31 : vector<1x256xi1> to vector<1x256xi1>
    %111 = vector.broadcast %110 : vector<1x256xi1> to vector<8x256xi1>
    %112 = arith.select %111, %108, %109 : vector<8x256xi1>, vector<8x256xf32>
    %c0_61 = arith.constant 0 : index
    %c33_62 = arith.constant 33 : index
    %113 = vector.load %arg7[%c0_61, %c33_62] : memref<8x290xf32, #tpu.memory_space<vmem>>, vector<8x256xf32>
    %c0_63 = arith.constant 0 : index
    %c34_64 = arith.constant 34 : index
    %114 = vector.load %arg7[%c0_63, %c34_64] : memref<8x290xf32, #tpu.memory_space<vmem>>, vector<8x256xf32>
    %cst_65 = arith.constant 0.000000e+00 : f32
    %115 = vector.broadcast %cst_65 : f32 to vector<8x256xf32>
    %116 = vector.shape_cast %40 : vector<1x256xi1> to vector<1x256xi1>
    %117 = vector.broadcast %116 : vector<1x256xi1> to vector<8x256xi1>
    %118 = arith.select %117, %114, %115 : vector<8x256xi1>, vector<8x256xf32>
    %119 = tpu.concatenate %90, %91, %96, %101, %102, %107, %112, %113, %118 in 0 : vector<8x256xf32>, vector<8x256xf32>, vector<8x256xf32>, vector<8x256xf32>, vector<8x256xf32>, vector<8x256xf32>, vector<8x256xf32>, vector<8x256xf32>, vector<8x256xf32> -> vector<72x256xf32>
    %120 = arith.truncf %119 : vector<72x256xf32> to vector<72x256xbf16>
    %c1_66 = arith.constant 1 : index
    %c0_67 = arith.constant 0 : index
    %c0_68 = arith.constant 0 : index
    %121 = vector.load %arg2[%c1_66, %c0_67, %c0_68] : memref<2x8x72xbf16, #tpu.memory_space<vmem>>, vector<1x8x72xbf16>
    %122 = vector.shape_cast %121 : vector<1x8x72xbf16> to vector<8x72xbf16>
    %cst_69 = arith.constant dense<0.000000e+00> : vector<8x256xf32>
    %123 = tpu.matmul %122, %120, %cst_69 {dimension_numbers = #tpu.dot_dimension_numbers<[1], [0], [0], [1], [0, 0, 1, 1], [], []>} : vector<8x72xbf16>, vector<72x256xbf16>, vector<8x256xf32> -> vector<8x256xf32>
    %c1_70 = arith.constant 1 : index
    %c0_71 = arith.constant 0 : index
    %c0_72 = arith.constant 0 : index
    %124 = vector.load %arg3[%c1_70, %c0_71, %c0_72] : memref<2x8x1xf32, #tpu.memory_space<vmem>>, vector<1x8x1xf32>
    %125 = vector.shape_cast %124 : vector<1x8x1xf32> to vector<8x1xf32>
    %126 = vector.broadcast %125 : vector<8x1xf32> to vector<8x256xf32>
    %127 = arith.addf %123, %126 : vector<8x256xf32>
    %cst_73 = arith.constant 0.000000e+00 : f32
    %128 = vector.broadcast %cst_73 : f32 to vector<8x256xf32>
    %129 = arith.maximumf %127, %128 : vector<8x256xf32>
    %c0_74 = arith.constant 0 : index
    %c0_75 = arith.constant 0 : index
    %130 = vector.load %arg4[%c0_74, %c0_75] : memref<16x8xbf16, #tpu.memory_space<vmem>>, vector<16x8xbf16>
    %131 = arith.truncf %129 : vector<8x256xf32> to vector<8x256xbf16>
    %cst_76 = arith.constant dense<0.000000e+00> : vector<16x256xf32>
    %132 = tpu.matmul %130, %131, %cst_76 {dimension_numbers = #tpu.dot_dimension_numbers<[1], [0], [0], [1], [0, 0, 1, 1], [], []>} : vector<16x8xbf16>, vector<8x256xbf16>, vector<16x256xf32> -> vector<16x256xf32>
    %c0_77 = arith.constant 0 : index
    %c0_78 = arith.constant 0 : index
    %133 = vector.load %arg5[%c0_77, %c0_78] : memref<16x1xf32, #tpu.memory_space<vmem>>, vector<16x1xf32>
    %134 = vector.broadcast %133 : vector<16x1xf32> to vector<16x256xf32>
    %135 = arith.addf %132, %134 : vector<16x256xf32>
    %c0_79 = arith.constant 0 : index
    %c0_80 = arith.constant 0 : index
    %c0_81 = arith.constant 0 : index
    %136 = vector.load %arg6[%c0_79, %c0_80, %c0_81] : memref<1x16x256xf32, #tpu.memory_space<vmem>>, vector<1x16x256xf32>
    %137 = vector.shape_cast %136 : vector<1x16x256xf32> to vector<16x256xf32>
    %138 = vector.shape_cast %135 : vector<16x256xf32> to vector<1x16x256xf32>
    tpu.vector_store %arg6[%c0_79, %c0_80, %c0_81], %138 {strides = array<i32>} : memref<1x16x256xf32, #tpu.memory_space<vmem>>, vector<1x16x256xf32>,
    return
  }
  func.func @transform_0(%arg0: i32) -> (i32, i32, i32) {
    %c0_i32 = arith.constant 0 : i32
    %c0_i32_0 = arith.constant 0 : i32
    %c0_i32_1 = arith.constant 0 : i32
    return %arg0, %c0_i32, %c0_i32_0 : i32, i32, i32
  }
  func.func @transform_1(%arg0: i32) -> (i32, i32, i32) {
    %c0_i32 = arith.constant 0 : i32
    %c0_i32_0 = arith.constant 0 : i32
    %c0_i32_1 = arith.constant 0 : i32
    %c0_i32_2 = arith.constant 0 : i32
    return %c0_i32, %c0_i32_0, %c0_i32_1 : i32, i32, i32
  }
  func.func @transform_2(%arg0: i32) -> (i32, i32, i32) {
    %c0_i32 = arith.constant 0 : i32
    %c0_i32_0 = arith.constant 0 : i32
    %c0_i32_1 = arith.constant 0 : i32
    %c0_i32_2 = arith.constant 0 : i32
    return %c0_i32, %c0_i32_0, %c0_i32_1 : i32, i32, i32
  }
  func.func @transform_3(%arg0: i32) -> (i32, i32) {
    %c0_i32 = arith.constant 0 : i32
    %c0_i32_0 = arith.constant 0 : i32
    %c0_i32_1 = arith.constant 0 : i32
    return %c0_i32, %c0_i32_0 : i32, i32
  }
  func.func @transform_4(%arg0: i32) -> (i32, i32) {
    %c0_i32 = arith.constant 0 : i32
    %c0_i32_0 = arith.constant 0 : i32
    %c0_i32_1 = arith.constant 0 : i32
    return %c0_i32, %c0_i32_0 : i32, i32
  }
  func.func @transform_5(%arg0: i32) -> (i32, i32, i32) {
    %c0_i32 = arith.constant 0 : i32
    %c0_i32_0 = arith.constant 0 : i32
    %c0_i32_1 = arith.constant 0 : i32
    return %arg0, %c0_i32, %c0_i32_0 : i32, i32, i32
  }
}

</mosaic_0001>

<llo_original>
// kernel: tpu_custom_call.1
$region0: #{tpu_custom_call.1}
  #allocation0 [shape = 'u32[]', space=smem, size = 0x4, offset = 0x4, fixed_abs, tag = 'smem constant byte address 0x4 - core index']
  #allocation1 [shape = 'u32[144,128]{1,0:T(1,128)}', space=vmem, size = 0x12000, scoped, tag = 'internal scratch']
  #allocation2 [shape = 'f32[8,290]{1,0:T(8,128)}', space=vmem, size = 0x3000, scoped, tag = 'scratch operand']
  %s0 = inlined_call_operand.vmem [shape: bf16[2,4,256], index: 0, kind: input, shape index: {}]
  %s1 = inlined_call_operand.vmem [shape: bf16[2,8,72], index: 1, kind: input, shape index: {}]
  %s2 = inlined_call_operand.vmem [shape: f32[2,8,1], index: 2, kind: input, shape index: {}]
  %s3 = inlined_call_operand.vmem [shape: bf16[16,8], index: 3, kind: input, shape index: {}]
  %s4 = inlined_call_operand.vmem [shape: f32[16,1], index: 4, kind: input, shape index: {}]
  %s5 = inlined_call_operand.hbm [shape: f32[2,16,256], index: 5, kind: output, shape index: {}]
  %s6 = sld [smem:[#allocation0]]
  $region53: #{tpu_custom_call.1} parent=0
    _
  %s8 = ssub.s32 1, %s6
  %s9 = scalar_select 0, %s8, %s6
  $region1: #{tpu_custom_call.1} parent=0
    #allocation3 [shape = 'u8[32768]{0}', space=vmem, size = 0x8000, scoped, tag = 'output window, operand 0']
    #allocation4 [shape = 's32[2]{0}', space=sflag, size = 0x8, scoped, tag = 'scoped memory for tpu_custom_call.1']
    %10 = vsyncpa [#allocation4], 0
    %s11 = scalar_lea.sflag [#allocation4], 1
    %12 = vsyncpa %s11, 0
    loop: start=0, step=1, limit=4
    $region2: #{tpu_custom_call.1} parent=1 // loop_pre_header
      _
    $region3: #{tpu_custom_call.1} parent=1 // loop_header
      %s14 = sphi 0, %s18
      %p15 = scmp.ge.s32.totalorder %s14, 4
      %s24 = sphi 0, %s26
      %s27 = sphi 0, %s24
      %s28 = sphi 0, %s27
      %s44 = sphi 0, %s28
      %s48 = sphi 0, %s48
      %s50 = sphi 0, %s48
      %s51 = sphi 0, %s50
      %s65 = sphi 0, %s51
      %s69 = sphi 0, %s69
      %s71 = sphi 0, %s69
      %s72 = sphi 0, %s71
      %s86 = sphi 0, %s72
      %s90 = sphi 0, %s90
      %s92 = sphi 0, %s90
      %s93 = sphi 0, %s92
      %s107 = sphi 0, %s93
      %s111 = sphi 0, %s111
      %s113 = sphi 0, %s111
      %s114 = sphi 0, %s113
      %s128 = sphi 0, %s114
      %s134 = sphi 0, %s136
      %s137 = sphi 0, %s134
      %s138 = sphi 0, %s137
      %s154 = sphi 0, %s138
    $region4: #{tpu_custom_call.1} parent=1 // loop_header_branch
      %17 = sbr.rel (%p15) target = $region8
    $region5: #{tpu_custom_call.1} parent=1 // loop_body
      %s19 = ssub.s32 %s14, 1
      %s20 = ssub.s32 %s14, 2
      %s21 = sadd.s32 %s14, 1
      %s22 = ssub.s32 %s14, %s21
      %p23 = scmp.eq.s32.totalorder %s22, 0
      %s25 = sadd.s32 %s24, 1
      %s26 = scalar_select %p23, %s24, %s25
      %p29 = pneg %p23
      %p30 = scmp.eq.s32.totalorder %s14, 1
      %p31 = por %p29, %p30
      %p32 = scmp.ne.s32.totalorder %s24, %s27
      %p33 = scmp.eq.s32.totalorder %s14, 0
      %p34 = por %p32, %p33
      %p35 = scmp.ne.s32.totalorder %s24, %s27
      %p36 = scmp.eq.s32.totalorder %s19, 1
      %p37 = por %p35, %p36
      %p38 = scmp.ne.s32.totalorder %s27, %s28
      %p39 = scmp.eq.s32.totalorder %s19, 0
      %p40 = por %p38, %p39
      %p41 = scmp.ne.s32.totalorder %s27, %s28
      %p42 = scmp.eq.s32.totalorder %s20, 1
      %p43 = por %p41, %p42
      %p45 = scmp.ne.s32.totalorder %s28, %s44
      %p46 = scmp.eq.s32.totalorder %s20, 0
      %p47 = por %p45, %p46
      %s49 = sadd.s32 %s48, 1
      %p52 = scmp.eq.s32.totalorder %s14, 1
      %p53 = scmp.ne.s32.totalorder %s48, %s50
      %p54 = scmp.eq.s32.totalorder %s14, 0
      %p55 = por %p53, %p54
      %p56 = scmp.ne.s32.totalorder %s48, %s50
      %p57 = scmp.eq.s32.totalorder %s19, 1
      %p58 = por %p56, %p57
      %p59 = scmp.ne.s32.totalorder %s50, %s51
      %p60 = scmp.eq.s32.totalorder %s19, 0
      %p61 = por %p59, %p60
      %p62 = scmp.ne.s32.totalorder %s50, %s51
      %p63 = scmp.eq.s32.totalorder %s20, 1
      %p64 = por %p62, %p63
      %p66 = scmp.ne.s32.totalorder %s51, %s65
      %p67 = scmp.eq.s32.totalorder %s20, 0
      %p68 = por %p66, %p67
      %s70 = sadd.s32 %s69, 1
      %p73 = scmp.eq.s32.totalorder %s14, 1
      %p74 = scmp.ne.s32.totalorder %s69, %s71
      %p75 = scmp.eq.s32.totalorder %s14, 0
      %p76 = por %p74, %p75
      %p77 = scmp.ne.s32.totalorder %s69, %s71
      %p78 = scmp.eq.s32.totalorder %s19, 1
      %p79 = por %p77, %p78
      %p80 = scmp.ne.s32.totalorder %s71, %s72
      %p81 = scmp.eq.s32.totalorder %s19, 0
      %p82 = por %p80, %p81
      %p83 = scmp.ne.s32.totalorder %s71, %s72
      %p84 = scmp.eq.s32.totalorder %s20, 1
      %p85 = por %p83, %p84
      %p87 = scmp.ne.s32.totalorder %s72, %s86
      %p88 = scmp.eq.s32.totalorder %s20, 0
      %p89 = por %p87, %p88
      %s91 = sadd.s32 %s90, 1
      %p94 = scmp.eq.s32.totalorder %s14, 1
      %p95 = scmp.ne.s32.totalorder %s90, %s92
      %p96 = scmp.eq.s32.totalorder %s14, 0
      %p97 = por %p95, %p96
      %p98 = scmp.ne.s32.totalorder %s90, %s92
      %p99 = scmp.eq.s32.totalorder %s19, 1
      %p100 = por %p98, %p99
      %p101 = scmp.ne.s32.totalorder %s92, %s93
      %p102 = scmp.eq.s32.totalorder %s19, 0
      %p103 = por %p101, %p102
      %p104 = scmp.ne.s32.totalorder %s92, %s93
      %p105 = scmp.eq.s32.totalorder %s20, 1
      %p106 = por %p104, %p105
      %p108 = scmp.ne.s32.totalorder %s93, %s107
      %p109 = scmp.eq.s32.totalorder %s20, 0
      %p110 = por %p108, %p109
      %s112 = sadd.s32 %s111, 1
      %p115 = scmp.eq.s32.totalorder %s14, 1
      %p116 = scmp.ne.s32.totalorder %s111, %s113
      %p117 = scmp.eq.s32.totalorder %s14, 0
      %p118 = por %p116, %p117
      %p119 = scmp.ne.s32.totalorder %s111, %s113
      %p120 = scmp.eq.s32.totalorder %s19, 1
      %p121 = por %p119, %p120
      %p122 = scmp.ne.s32.totalorder %s113, %s114
      %p123 = scmp.eq.s32.totalorder %s19, 0
      %p124 = por %p122, %p123
      %p125 = scmp.ne.s32.totalorder %s113, %s114
      %p126 = scmp.eq.s32.totalorder %s20, 1
      %p127 = por %p125, %p126
      %p129 = scmp.ne.s32.totalorder %s114, %s128
      %p130 = scmp.eq.s32.totalorder %s20, 0
      %p131 = por %p129, %p130
      %s132 = ssub.s32 %s14, %s21
      %p133 = scmp.eq.s32.totalorder %s132, 0
      %s135 = sadd.s32 %s134, 1
      %s136 = scalar_select %p133, %s134, %s135
      %p139 = pneg %p133
      %p140 = scmp.eq.s32.totalorder %s14, 1
      %p141 = por %p139, %p140
      %p142 = scmp.ne.s32.totalorder %s134, %s137
      %p143 = scmp.eq.s32.totalorder %s14, 0
      %p144 = por %p142, %p143
      %p145 = scmp.ne.s32.totalorder %s134, %s137
      %p146 = scmp.eq.s32.totalorder %s19, 1
      %p147 = por %p145, %p146
      %p148 = scmp.ne.s32.totalorder %s137, %s138
      %p149 = scmp.eq.s32.totalorder %s19, 0
      %p150 = por %p148, %p149
      %p151 = scmp.ne.s32.totalorder %s137, %s138
      %p152 = scmp.eq.s32.totalorder %s20, 1
      %p153 = por %p151, %p152
      %p155 = scmp.ne.s32.totalorder %s138, %s154
      %p156 = scmp.eq.s32.totalorder %s20, 0
      %p157 = por %p155, %p156
      %p158 = scmp.le.s32.totalorder 1, %s14
      %p159 = scmp.lt.s32.totalorder %s14, 3
      %p160 = pnand %p158, %p159
      %p161 = pneg %p160
      // Predicated region
      $region9: #{tpu_custom_call.1} parent=5 // pred_check
        _
      $region10: #{tpu_custom_call.1} parent=5 // pred_check_branch
        %163 = sbr.rel (%p160) target = $region12
      $region11: #{tpu_custom_call.1} parent=5 // pred_region
        %s164 = ssub.s32 %s14, 1
        // Predicated region
        $region13: #{tpu_custom_call.1} parent=11 // pred_check
          %p165 = pneg %p61
        $region14: #{tpu_custom_call.1} parent=11 // pred_check_branch
          %167 = sbr.rel (%p165) target = $region16
        $region15: #{tpu_custom_call.1} parent=11 // pred_region
          _
        $region16: #{tpu_custom_call.1} parent=11 // pred_fallthru
          _
        // Predicated region
        $region17: #{tpu_custom_call.1} parent=11 // pred_check
          %p168 = pneg %p82
        $region18: #{tpu_custom_call.1} parent=11 // pred_check_branch
          %170 = sbr.rel (%p168) target = $region20
        $region19: #{tpu_custom_call.1} parent=11 // pred_region
          _
        $region20: #{tpu_custom_call.1} parent=11 // pred_fallthru
          _
        // Predicated region
        $region21: #{tpu_custom_call.1} parent=11 // pred_check
          %p171 = pneg %p103
        $region22: #{tpu_custom_call.1} parent=11 // pred_check_branch
          %173 = sbr.rel (%p171) target = $region24
        $region23: #{tpu_custom_call.1} parent=11 // pred_region
          _
        $region24: #{tpu_custom_call.1} parent=11 // pred_fallthru
          _
        // Predicated region
        $region25: #{tpu_custom_call.1} parent=11 // pred_check
          %p174 = pneg %p124
        $region26: #{tpu_custom_call.1} parent=11 // pred_check_branch
          %176 = sbr.rel (%p174) target = $region28
        $region27: #{tpu_custom_call.1} parent=11 // pred_region
          _
        $region28: #{tpu_custom_call.1} parent=11 // pred_fallthru
          _
      $region12: #{tpu_custom_call.1} parent=5 // pred_fallthru
        _
      %p177 = scmp.lt.s32.totalorder %s14, 2
      // Predicated region
      $region29: #{tpu_custom_call.1} parent=5 // pred_check
        %p178 = pneg %p177
      $region30: #{tpu_custom_call.1} parent=5 // pred_check_branch
        %180 = sbr.rel (%p178) target = $region32
      $region31: #{tpu_custom_call.1} parent=5 // pred_region
        // Predicated region
        $region33: #{tpu_custom_call.1} parent=31 // pred_check
          %p181 = pneg %p34
        $region34: #{tpu_custom_call.1} parent=31 // pred_check_branch
          %183 = sbr.rel (%p181) target = $region36
        $region35: #{tpu_custom_call.1} parent=31 // pred_region
          %p184 = scmp.lt.s32.totalorder %s14, 1
          %s185 = scalar_select %p184, %s14, 1
          %s186 = smul.addr %s185, 2
          %s187 = smul.addr %s186, 2
          %s188 = scalar_lea.vmem %s0, %s187
        $region36: #{tpu_custom_call.1} parent=31 // pred_fallthru
          _
      $region32: #{tpu_custom_call.1} parent=5 // pred_fallthru
        _
      %p189 = scmp.le.s32.totalorder 1, %s14
      %p190 = scmp.lt.s32.totalorder %s14, 3
      %p191 = pnand %p189, %p190
      %p192 = pneg %p191
      // Predicated region
      $region37: #{tpu_custom_call.1} parent=5 // pred_check
        _
      $region38: #{tpu_custom_call.1} parent=5 // pred_check_branch
        %194 = sbr.rel (%p191) target = $region40
      $region39: #{tpu_custom_call.1} parent=5 // pred_region
        %s195 = ssub.s32 %s14, 1
        %p196 = scmp.lt.s32.totalorder %s19, 1
        %s197 = scalar_select %p196, %s19, 1
        %s198 = smul.addr %s197, 2
        %s199 = smul.addr %s198, 2
        %s200 = scalar_lea.vmem %s0, %s199
        %p201 = pneg %p40
        %p202 = pneg %p37
        %p203 = pneg %p61
        %p204 = pneg %p58
        %p205 = pneg %p82
        %p206 = pneg %p79
        %p207 = pneg %p103
        %p208 = pneg %p100
        %p209 = pneg %p124
        %p210 = pneg %p121
        %p211 = pneg %p150
        %p212 = pneg %p147
        %s213 = sand.u32 %s137, 1
        %s214 = scalar_lea.sflag [#allocation4], %s213
        %s215 = sand.u32 %s137, 1
        %s216 = smul.addr %s215, 32
        %s217 = scalar_lea.vmem [#allocation3], %s216
        %p218 = scmp.lt.s32.totalorder %s19, 1
        %s219 = scalar_select %p218, %s19, 1
        %s220 = smul.addr %s219, 2
        %s221 = smul.addr %s220, 2
        %s222 = scalar_lea.vmem %s0, %s221
        %224 = vst [vmem:[#allocation2] sm:$0xff] 0.0
        %225 = vst [vmem:[#allocation2 + $0x8] sm:$0xff] 0.0
        %vm226 = vcmask 277504
        %227 = vst.msk [vmem:[#allocation2 + $0x10] sm:$0xff] %vm226, 0.0
        %v228 = vld [vmem:[%s222] sm:$0xf]
        %v229 = vunpack.c.l.bf16 %v228
        %v231 = vcombine.high %v229, %v229
        %232 = vrot.lane.b32.xlu0 %v229, 17
        %v233 = vpop.permute.xlu0 %232
        %234 = vrot.lane.b32.xlu0 %v231, 17
        %v235 = vpop.permute.xlu0 %234
        %vm236 = vcmask 138240
        %v237 = vsel %vm236, %v233, %v235
        %vm241 = vcmask 1043592
        %242 = vst.msk [vmem:[#allocation2] sm:$0xf] %vm241, %v233
        %243 = vst [vmem:[#allocation2 + $0x8] sm:$0xf] %v237
        %vm244 = vcmask 134144
        %245 = vst.msk [vmem:[#allocation2 + $0x10] sm:$0xf] %vm244, %v235
        %v246 = vlaneseq
        %v247 = vand.u32 %v246, 127
        %v248 = vadd.s32 %v247, 128
        %vm249 = vcmp.lt.s32.totalorder %v247, 0
        %v250 = vsub.s32 0, %v247
        %v251 = vsel %vm249, %v250, %v247
        %v252 = vshrl.u32 %v251, 4
        %v253 = vand.u32 %v251, 15
        %v254 = vsub.s32 0, %v253
        %v255 = vsel %vm249, %v254, %v253
        %vm256 = vcmp.lt.s32.totalorder %v248, 0
        %v257 = vsub.s32 0, %v248
        %v258 = vsel %vm256, %v257, %v248
        %v259 = vshrl.u32 %v258, 4
        %v260 = vand.u32 %v258, 15
        %v261 = vsub.s32 0, %v260
        %v262 = vsel %vm256, %v261, %v260
        %vm263 = vcmp.ne.s32.totalorder %v255, 0
        %vm264 = vcmp.ne.s32.totalorder %v262, 0
        %vm265 = vcmp.lt.s32.totalorder %v255, 0
        %vm266 = vcmp.lt.s32.totalorder %v262, 0
        %vm267 = vmand %vm265, %vm263
        %vm268 = vmand %vm266, %vm264
        %v269 = vadd.s32 %v255, 16
        %v270 = vadd.s32 %v262, 16
        %v271 = vsel %vm267, %v269, %v255
        %v272 = vsel %vm268, %v270, %v262
        %v273 = vadd.s32 %v271, 4294967295
        %v274 = vadd.s32 %v272, 4294967295
        %vm275 = vcmp.ge.s32.totalorder %v273, 0
        %vm276 = vcmp.ge.s32.totalorder %v274, 0
        %vm277 = vcmp.lt.s32.totalorder %v273, 16
        %vm278 = vcmp.lt.s32.totalorder %v274, 16
        %vm279 = vmand %vm275, %vm277
        %vm280 = vmand %vm276, %vm278
        %v281 = vadd.s32 %v271, 1
        %v282 = vadd.s32 %v272, 1
        %vm283 = vcmp.ge.s32.totalorder %v281, 0
        %vm284 = vcmp.ge.s32.totalorder %v282, 0
        %vm285 = vcmp.lt.s32.totalorder %v281, 16
        %vm286 = vcmp.lt.s32.totalorder %v282, 16
        %vm287 = vmand %vm283, %vm285
        %vm288 = vmand %vm284, %vm286
        %v289 = vld [vmem:[#allocation2] sm:$0xff]
        %v290 = vld [vmem:[#allocation2 + $0x8] sm:$0xff]
        %v291 = vsel %vm279, 1, 0
        %v292 = vsel %vm280, 1, 0
        %vm293 = vcmp.eq.s32.totalorder %v291, 1
        %vm294 = vcmp.eq.s32.totalorder %v292, 1
        %v295 = vsel %vm293, %v289, 0.0
        %v296 = vsel %vm294, %v290, 0.0
        %v297 = vld [vmem:[#allocation2 + $0x10] sm:$0xff]
        %v298 = vsel %vm287, 1, 0
        %v299 = vsel %vm288, 1, 0
        %vm300 = vcmp.eq.s32.totalorder %v298, 1
        %vm301 = vcmp.eq.s32.totalorder %v299, 1
        %305 = vrot.lane.b32.xlu0 %v289, 126
        %v306 = vpop.permute.xlu0 %305
        %307 = vrot.lane.b32.xlu0 %v290, 126
        %v308 = vpop.permute.xlu0 %307
        %309 = vrot.lane.b32.xlu0 %v297, 126
        %v310 = vpop.permute.xlu0 %309
        %vm311 = vcmask 1031168
        %v312 = vsel %vm311, %v306, %v308
        %v313 = vsel %vm311, %v308, %v310
        %v316 = vsel %vm300, %v312, 0.0
        %v317 = vsel %vm301, %v313, 0.0
        %318 = vrot.lane.b32.xlu0 %v289, 112
        %v319 = vpop.permute.xlu0 %318
        %320 = vrot.lane.b32.xlu0 %v290, 112
        %v321 = vpop.permute.xlu0 %320
        %322 = vrot.lane.b32.xlu0 %v297, 112
        %v323 = vpop.permute.xlu0 %322
        %vm324 = vcmask 916480
        %v325 = vsel %vm324, %v319, %v321
        %v326 = vsel %vm324, %v321, %v323
        %v329 = vsel %vm293, %v325, 0.0
        %v330 = vsel %vm294, %v326, 0.0
        %331 = vrot.lane.b32.xlu0 %v289, 110
        %v332 = vpop.permute.xlu0 %331
        %333 = vrot.lane.b32.xlu0 %v290, 110
        %v334 = vpop.permute.xlu0 %333
        %335 = vrot.lane.b32.xlu0 %v297, 110
        %v336 = vpop.permute.xlu0 %335
        %vm337 = vcmask 900096
        %v338 = vsel %vm337, %v332, %v334
        %v339 = vsel %vm337, %v334, %v336
        %v342 = vsel %vm300, %v338, 0.0
        %v343 = vsel %vm301, %v339, 0.0
        %344 = vrot.lane.b32.xlu0 %v289, 96
        %v345 = vpop.permute.xlu0 %344
        %346 = vrot.lane.b32.xlu0 %v290, 96
        %v347 = vpop.permute.xlu0 %346
        %348 = vrot.lane.b32.xlu0 %v297, 96
        %v349 = vpop.permute.xlu0 %348
        %vm350 = vcmask 785408
        %v351 = vsel %vm350, %v345, %v347
        %v352 = vsel %vm350, %v347, %v349
        %v355 = vsel %vm293, %v351, 0.0
        %v356 = vsel %vm294, %v352, 0.0
        %357 = vrot.lane.b32.xlu0 %v289, 94
        %v358 = vpop.permute.xlu0 %357
        %359 = vrot.lane.b32.xlu0 %v290, 94
        %v360 = vpop.permute.xlu0 %359
        %361 = vrot.lane.b32.xlu0 %v297, 94
        %v362 = vpop.permute.xlu0 %361
        %vm363 = vcmask 769024
        %v364 = vsel %vm363, %v358, %v360
        %v365 = vsel %vm363, %v360, %v362
        %v368 = vsel %vm300, %v364, 0.0
        %v369 = vsel %vm301, %v365, 0.0
        %370 = vrot.lane.b32.xlu0 %v289, 127
        %v371 = vpop.permute.xlu0 %370
        %372 = vrot.lane.b32.xlu0 %v290, 127
        %v373 = vpop.permute.xlu0 %372
        %374 = vrot.lane.b32.xlu0 %v297, 127
        %v375 = vpop.permute.xlu0 %374
        %vm376 = vcmask 1039360
        %v377 = vsel %vm376, %v371, %v373
        %v378 = vsel %vm376, %v373, %v375
        %381 = vrot.lane.b32.xlu0 %v289, 111
        %v382 = vpop.permute.xlu0 %381
        %383 = vrot.lane.b32.xlu0 %v290, 111
        %v384 = vpop.permute.xlu0 %383
        %385 = vrot.lane.b32.xlu0 %v297, 111
        %v386 = vpop.permute.xlu0 %385
        %vm387 = vcmask 908288
        %v388 = vsel %vm387, %v382, %v384
        %v389 = vsel %vm387, %v384, %v386
        %392 = vrot.lane.b32.xlu0 %v289, 95
        %v393 = vpop.permute.xlu0 %392
        %394 = vrot.lane.b32.xlu0 %v290, 95
        %v395 = vpop.permute.xlu0 %394
        %396 = vrot.lane.b32.xlu0 %v297, 95
        %v397 = vpop.permute.xlu0 %396
        %vm398 = vcmask 777216
        %v399 = vsel %vm398, %v393, %v395
        %v400 = vsel %vm398, %v395, %v397
        %v403 = vpack.c.bf16 %v377, %v295
        %v404 = vpack.c.bf16 %v378, %v296
        %v405 = vpack.c.bf16 %v329, %v316
        %v406 = vpack.c.bf16 %v330, %v317
        %v407 = vpack.c.bf16 %v342, %v388
        %v408 = vpack.c.bf16 %v343, %v389
        %v409 = vpack.c.bf16 %v399, %v355
        %v410 = vpack.c.bf16 %v400, %v356
        %v411 = vpack.c.bf16 %v368, %v368
        %v412 = vpack.c.bf16 %v369, %v369
        %v413 = vld [vmem:[%s1] sm:$0xf]
        %v414 = vld [vmem:[%s2] sm:$0xff]
        %416 = vset.pattern.permute.xlu0 0
        %417 = vperm.xlu0 %416, %v414
        %v418 = vpop.permute.xlu0 %417
        %vm420 = vcmask 588800
        %v422 = vsel %vm420, %v413, 0
        %vm424 = vcmask 1043456
        %v426 = vsel %vm424, %v411, 0
        %v429 = vsel %vm424, %v412, 0
        %431 = vmatprep.subr.bf16.mxu0 %v404
        %432 = vmatpush1.bf16.msra.mxu0 %v403
        %433 = vmatprep.subr.bf16.mxu0 %v406
        %434 = vmatpush1.bf16.msra.mxu0 %v405
        %435 = vmatprep.subr.bf16.mxu0 %v408
        %436 = vmatpush1.bf16.msra.mxu0 %v407
        %437 = vmatprep.subr.bf16.mxu0 %v410
        %438 = vmatpush1.bf16.msra.mxu0 %v409
        %439 = vmatprep.subr.bf16.mxu0 %v429
        %440 = vmatpush1.bf16.msra.mxu0 %v426
        %441 = vmatprep.subr.bf16.mxu0 0
        %442 = vmatpush1.bf16.msra.mxu0 0
        %443 = vmatprep.subr.bf16.mxu0 0
        %444 = vmatpush1.bf16.msra.mxu0 0
        %445 = vmatprep.subr.bf16.mxu0 0
        %446 = vmatpush1.bf16.msra.mxu0 0
        %447 = vmatprep.subr.bf16.mxu0 0
        %448 = vmatpush1.bf16.msra.mxu0 0
        %449 = vmatprep.subr.bf16.mxu0 0
        %450 = vmatpush1.bf16.msra.mxu0 0
        %451 = vmatprep.subr.bf16.mxu0 0
        %452 = vmatpush1.bf16.msra.mxu0 0
        %453 = vmatprep.subr.bf16.mxu0 0
        %454 = vmatpush1.bf16.msra.mxu0 0
        %455 = vmatprep.subr.bf16.mxu0 0
        %456 = vmatpush1.bf16.msra.mxu0 0
        %457 = vmatprep.subr.bf16.mxu0 0
        %458 = vmatpush1.bf16.msra.mxu0 0
        %459 = vmatprep.subr.bf16.mxu0 0
        %460 = vmatpush1.bf16.msra.mxu0 0
        %461 = vmatprep.subr.bf16.mxu0 0
        %462 = vmatpush1.bf16.msra.mxu0 0
        %463 = vmatprep.mubr.bf16.mxu0 0
        %464 = vmatmul.mubr.bf16.gmra.mrb[0].mxu0 %v422
        %v465 = vpop.f32.mrb[0].mxu0
        %v466 = vadd.f32 %v418, %v465
        %v467 = vpop.f32.mrb[0].mxu0
        %v468 = vadd.f32 %v418, %v467
        %v469 = vpop.f32.mrb[0].mxu0
        %v470 = vpop.f32.mrb[0].mxu0
        %471 = vdwg.mxu0
        %v472 = vmax.f32 %v466, 0.0
        %v473 = vmax.f32 %v468, 0.0
        %476 = vrot.lane.b32.xlu0 %v472, 17
        %v477 = vpop.permute.xlu0 %476
        %478 = vrot.lane.b32.xlu0 %v473, 17
        %v479 = vpop.permute.xlu0 %478
        %v480 = vsel %vm236, %v477, %v479
        %vm484 = vcmask 1047688
        %485 = vst.msk [vmem:[#allocation2] sm:$0xff] %vm484, %v477
        %486 = vst [vmem:[#allocation2 + $0x8] sm:$0xff] %v480
        %487 = vst.msk [vmem:[#allocation2 + $0x10] sm:$0xff] %vm236, %v479
        %v488 = vld [vmem:[#allocation2] sm:$0xff]
        %v489 = vld [vmem:[#allocation2 + $0x8] sm:$0xff]
        %v490 = vsel %vm293, %v488, 0.0
        %v491 = vsel %vm294, %v489, 0.0
        %v492 = vld [vmem:[#allocation2 + $0x10] sm:$0xff]
        %496 = vrot.lane.b32.xlu0 %v488, 126
        %v497 = vpop.permute.xlu0 %496
        %498 = vrot.lane.b32.xlu0 %v489, 126
        %v499 = vpop.permute.xlu0 %498
        %500 = vrot.lane.b32.xlu0 %v492, 126
        %v501 = vpop.permute.xlu0 %500
        %v502 = vsel %vm311, %v497, %v499
        %v503 = vsel %vm311, %v499, %v501
        %v506 = vsel %vm300, %v502, 0.0
        %v507 = vsel %vm301, %v503, 0.0
        %508 = vrot.lane.b32.xlu0 %v488, 112
        %v509 = vpop.permute.xlu0 %508
        %510 = vrot.lane.b32.xlu0 %v489, 112
        %v511 = vpop.permute.xlu0 %510
        %512 = vrot.lane.b32.xlu0 %v492, 112
        %v513 = vpop.permute.xlu0 %512
        %v514 = vsel %vm324, %v509, %v511
        %v515 = vsel %vm324, %v511, %v513
        %v518 = vsel %vm293, %v514, 0.0
        %v519 = vsel %vm294, %v515, 0.0
        %520 = vrot.lane.b32.xlu0 %v488, 110
        %v521 = vpop.permute.xlu0 %520
        %522 = vrot.lane.b32.xlu0 %v489, 110
        %v523 = vpop.permute.xlu0 %522
        %524 = vrot.lane.b32.xlu0 %v492, 110
        %v525 = vpop.permute.xlu0 %524
        %v526 = vsel %vm337, %v521, %v523
        %v527 = vsel %vm337, %v523, %v525
        %v530 = vsel %vm300, %v526, 0.0
        %v531 = vsel %vm301, %v527, 0.0
        %532 = vrot.lane.b32.xlu0 %v488, 96
        %v533 = vpop.permute.xlu0 %532
        %534 = vrot.lane.b32.xlu0 %v489, 96
        %v535 = vpop.permute.xlu0 %534
        %536 = vrot.lane.b32.xlu0 %v492, 96
        %v537 = vpop.permute.xlu0 %536
        %v538 = vsel %vm350, %v533, %v535
        %v539 = vsel %vm350, %v535, %v537
        %v542 = vsel %vm293, %v538, 0.0
        %v543 = vsel %vm294, %v539, 0.0
        %544 = vrot.lane.b32.xlu0 %v488, 94
        %v545 = vpop.permute.xlu0 %544
        %546 = vrot.lane.b32.xlu0 %v489, 94
        %v547 = vpop.permute.xlu0 %546
        %548 = vrot.lane.b32.xlu0 %v492, 94
        %v549 = vpop.permute.xlu0 %548
        %v550 = vsel %vm363, %v545, %v547
        %v551 = vsel %vm363, %v547, %v549
        %v554 = vsel %vm300, %v550, 0.0
        %v555 = vsel %vm301, %v551, 0.0
        %556 = vrot.lane.b32.xlu0 %v488, 127
        %v557 = vpop.permute.xlu0 %556
        %558 = vrot.lane.b32.xlu0 %v489, 127
        %v559 = vpop.permute.xlu0 %558
        %560 = vrot.lane.b32.xlu0 %v492, 127
        %v561 = vpop.permute.xlu0 %560
        %v562 = vsel %vm376, %v557, %v559
        %v563 = vsel %vm376, %v559, %v561
        %566 = vrot.lane.b32.xlu0 %v488, 111
        %v567 = vpop.permute.xlu0 %566
        %568 = vrot.lane.b32.xlu0 %v489, 111
        %v569 = vpop.permute.xlu0 %568
        %570 = vrot.lane.b32.xlu0 %v492, 111
        %v571 = vpop.permute.xlu0 %570
        %v572 = vsel %vm387, %v567, %v569
        %v573 = vsel %vm387, %v569, %v571
        %576 = vrot.lane.b32.xlu0 %v488, 95
        %v577 = vpop.permute.xlu0 %576
        %578 = vrot.lane.b32.xlu0 %v489, 95
        %v579 = vpop.permute.xlu0 %578
        %580 = vrot.lane.b32.xlu0 %v492, 95
        %v581 = vpop.permute.xlu0 %580
        %v582 = vsel %vm398, %v577, %v579
        %v583 = vsel %vm398, %v579, %v581
        %v586 = vpack.c.bf16 %v562, %v490
        %v587 = vpack.c.bf16 %v563, %v491
        %v588 = vpack.c.bf16 %v518, %v506
        %v589 = vpack.c.bf16 %v519, %v507
        %v590 = vpack.c.bf16 %v530, %v572
        %v591 = vpack.c.bf16 %v531, %v573
        %v592 = vpack.c.bf16 %v582, %v542
        %v593 = vpack.c.bf16 %v583, %v543
        %v594 = vpack.c.bf16 %v554, %v554
        %v595 = vpack.c.bf16 %v555, %v555
        %s596 = scalar_lea.vmem %s1, 4
        %v597 = vld [vmem:[%s596] sm:$0xf]
        %s598 = scalar_lea.vmem %s2, 8
        %v599 = vld [vmem:[%s598] sm:$0xff]
        %601 = vset.pattern.permute.xlu0 0
        %602 = vperm.xlu0 %601, %v599
        %v603 = vpop.permute.xlu0 %602
        %v606 = vsel %vm420, %v597, 0
        %v609 = vsel %vm424, %v594, 0
        %v612 = vsel %vm424, %v595, 0
        %614 = vmatprep.subr.bf16.mxu0 %v587
        %615 = vmatpush1.bf16.msra.mxu0 %v586
        %616 = vmatprep.subr.bf16.mxu0 %v589
        %617 = vmatpush1.bf16.msra.mxu0 %v588
        %618 = vmatprep.subr.bf16.mxu0 %v591
        %619 = vmatpush1.bf16.msra.mxu0 %v590
        %620 = vmatprep.subr.bf16.mxu0 %v593
        %621 = vmatpush1.bf16.msra.mxu0 %v592
        %622 = vmatprep.subr.bf16.mxu0 %v612
        %623 = vmatpush1.bf16.msra.mxu0 %v609
        %624 = vmatprep.subr.bf16.mxu0 0
        %625 = vmatpush1.bf16.msra.mxu0 0
        %626 = vmatprep.subr.bf16.mxu0 0
        %627 = vmatpush1.bf16.msra.mxu0 0
        %628 = vmatprep.subr.bf16.mxu0 0
        %629 = vmatpush1.bf16.msra.mxu0 0
        %630 = vmatprep.subr.bf16.mxu0 0
        %631 = vmatpush1.bf16.msra.mxu0 0
        %632 = vmatprep.subr.bf16.mxu0 0
        %633 = vmatpush1.bf16.msra.mxu0 0
        %634 = vmatprep.subr.bf16.mxu0 0
        %635 = vmatpush1.bf16.msra.mxu0 0
        %636 = vmatprep.subr.bf16.mxu0 0
        %637 = vmatpush1.bf16.msra.mxu0 0
        %638 = vmatprep.subr.bf16.mxu0 0
        %639 = vmatpush1.bf16.msra.mxu0 0
        %640 = vmatprep.subr.bf16.mxu0 0
        %641 = vmatpush1.bf16.msra.mxu0 0
        %642 = vmatprep.subr.bf16.mxu0 0
        %643 = vmatpush1.bf16.msra.mxu0 0
        %644 = vmatprep.subr.bf16.mxu0 0
        %645 = vmatpush1.bf16.msra.mxu0 0
        %646 = vmatprep.mubr.bf16.mxu0 0
        %647 = vmatmul.mubr.bf16.gmra.mrb[0].mxu0 %v606
        %v648 = vpop.f32.mrb[0].mxu0
        %v649 = vadd.f32 %v603, %v648
        %v650 = vpop.f32.mrb[0].mxu0
        %v651 = vadd.f32 %v603, %v650
        %v652 = vpop.f32.mrb[0].mxu0
        %v653 = vpop.f32.mrb[0].mxu0
        %654 = vdwg.mxu0
        %v655 = vmax.f32 %v649, 0.0
        %v656 = vmax.f32 %v651, 0.0
        %v657 = vld [vmem:[%s3] sm:$0xf]
        %v658 = vld [vmem:[%s3 + $0x4] sm:$0xf]
        %v659 = vpack.c.bf16 %v655, %v655
        %v660 = vpack.c.bf16 %v656, %v656
        %v661 = vld [vmem:[%s4] sm:$0xff]
        %v662 = vld [vmem:[%s4 + $0x8] sm:$0xff]
        %664 = vset.pattern.permute.xlu0 0
        %665 = vperm.xlu0 %664, %v661
        %v666 = vpop.permute.xlu0 %665
        %669 = vset.pattern.permute.xlu0 0
        %670 = vperm.xlu0 %669, %v662
        %v671 = vpop.permute.xlu0 %670
        %v675 = vunpack.c.l.b16 %v657
        %v676 = vunpack.c.l.b16 %v658
        %v677 = vpack.c.b16 %v676, %v675
        %vm678 = vcmask 64512
        %v680 = vsel %vm678, %v677, 0
        %v683 = vsel %vm424, %v659, 0
        %v686 = vsel %vm424, %v660, 0
        %688 = vmatprep.subr.bf16.mxu0 %v686
        %689 = vmatpush1.bf16.msra.mxu0 %v683
        %690 = vmatprep.subr.bf16.mxu0 0
        %691 = vmatpush1.bf16.msra.mxu0 0
        %692 = vmatprep.subr.bf16.mxu0 0
        %693 = vmatpush1.bf16.msra.mxu0 0
        %694 = vmatprep.subr.bf16.mxu0 0
        %695 = vmatpush1.bf16.msra.mxu0 0
        %696 = vmatprep.subr.bf16.mxu0 0
        %697 = vmatpush1.bf16.msra.mxu0 0
        %698 = vmatprep.subr.bf16.mxu0 0
        %699 = vmatpush1.bf16.msra.mxu0 0
        %700 = vmatprep.subr.bf16.mxu0 0
        %701 = vmatpush1.bf16.msra.mxu0 0
        %702 = vmatprep.subr.bf16.mxu0 0
        %703 = vmatpush1.bf16.msra.mxu0 0
        %704 = vmatprep.subr.bf16.mxu0 0
        %705 = vmatpush1.bf16.msra.mxu0 0
        %706 = vmatprep.subr.bf16.mxu0 0
        %707 = vmatpush1.bf16.msra.mxu0 0
        %708 = vmatprep.subr.bf16.mxu0 0
        %709 = vmatpush1.bf16.msra.mxu0 0
        %710 = vmatprep.subr.bf16.mxu0 0
        %711 = vmatpush1.bf16.msra.mxu0 0
        %712 = vmatprep.subr.bf16.mxu0 0
        %713 = vmatpush1.bf16.msra.mxu0 0
        %714 = vmatprep.subr.bf16.mxu0 0
        %715 = vmatpush1.bf16.msra.mxu0 0
        %716 = vmatprep.subr.bf16.mxu0 0
        %717 = vmatpush1.bf16.msra.mxu0 0
        %718 = vmatprep.subr.bf16.mxu0 0
        %719 = vmatpush1.bf16.msra.mxu0 0
        %720 = vmatprep.mubr.bf16.mxu0 0
        %721 = vmatmul.mubr.bf16.gmra.mrb[0].mxu0 %v680
        %v722 = vpop.f32.mrb[0].mxu0
        %v723 = vadd.f32 %v666, %v722
        %v724 = vpop.f32.mrb[0].mxu0
        %v725 = vadd.f32 %v666, %v724
        %v726 = vpop.f32.mrb[0].mxu0
        %v727 = vadd.f32 %v671, %v726
        %v728 = vpop.f32.mrb[0].mxu0
        %v729 = vadd.f32 %v671, %v728
        %730 = vdwg.mxu0
        %731 = vst [vmem:[%s217] sm:$0xff] %v723
        %732 = vst [vmem:[%s217 + $0x8] sm:$0xff] %v725
        %733 = vst [vmem:[%s217 + $0x10] sm:$0xff] %v727
        %734 = vst [vmem:[%s217 + $0x18] sm:$0xff] %v729
        %s735 = sand.u32 %s137, 1
        %s736 = scalar_lea.sflag [#allocation4], %s735
        %s737 = sand.u32 %s137, 1
        %s738 = smul.addr %s737, 32
        %s739 = scalar_lea.vmem [#allocation3], %s738
        // Predicated region
        $region41: #{tpu_custom_call.1} parent=39 // pred_check
          %p740 = pneg %p147
        $region42: #{tpu_custom_call.1} parent=39 // pred_check_branch
          %742 = sbr.rel (%p740) target = $region44
        $region43: #{tpu_custom_call.1} parent=39 // pred_region
          %s744 = ssub.s32 512, 512
          %745 = vsyncadd %s736, %s744
          %s746 = smul.addr %s19, 4
          %s747 = smul.addr %s746, 128
          %s748 = scalar_lea.hbm %s5, %s747
          %s749 = sshll.u32 %s739, 4
          %s750 = int_to_ptr.vmem [resolvable:$true] %s749
          %755 = dma.vmem_to_hbm [thread:$0]  %s750, 512, %s748, %s736, 256, 256, 16
        $region44: #{tpu_custom_call.1} parent=39 // pred_fallthru
          _
      $region40: #{tpu_custom_call.1} parent=5 // pred_fallthru
        _
      %p756 = scmp.le.s32.totalorder 2, %s14
      // Predicated region
      $region45: #{tpu_custom_call.1} parent=5 // pred_check
        %p757 = pneg %p756
      $region46: #{tpu_custom_call.1} parent=5 // pred_check_branch
        %759 = sbr.rel (%p757) target = $region48
      $region47: #{tpu_custom_call.1} parent=5 // pred_region
        %s760 = ssub.s32 %s14, 2
        // Predicated region
        $region49: #{tpu_custom_call.1} parent=47 // pred_check
          %p761 = pneg %p153
        $region50: #{tpu_custom_call.1} parent=47 // pred_check_branch
          %763 = sbr.rel (%p761) target = $region52
        $region51: #{tpu_custom_call.1} parent=47 // pred_region
          %s764 = sand.u32 %s138, 1
          %s765 = scalar_lea.sflag [#allocation4], %s764
          %s766 = sand.u32 %s138, 1
          %s767 = smul.addr %s766, 32
          %s768 = scalar_lea.vmem [#allocation3], %s767
          %769 = dma.done %s765, 512
        $region52: #{tpu_custom_call.1} parent=47 // pred_fallthru
          _
      $region48: #{tpu_custom_call.1} parent=5 // pred_fallthru
        _
    $region6: #{tpu_custom_call.1} parent=1 // loop_footer
      %s18 = sadd.s32 1, %s14
    $region7: #{tpu_custom_call.1} parent=1 // loop_footer_branch
      %13 = sbr.rel target = $region3
    $region8: #{tpu_custom_call.1} parent=1 // loop_exit
      _
    %770 = vsyncpa [#allocation4], 1
    %s771 = scalar_lea.sflag [#allocation4], 1
    %772 = vsyncpa %s771, 1

</llo_original>
